<compile_context>
chip_gen: v7x
topology: tpu7x:2x2x1
jax: 0.10.0
libtpu: 0.0.40
codegen_flags: <defaults>
</compile_context>

<pallas_src>
import functools

import jax
import jax.numpy as jnp
import numpy as np
from jax.experimental import pallas as pl
from jax.experimental.pallas import tpu as pltpu


# Below this many output bytes, XLA's native concat (which can also fuse into
# the consumer) beats a Pallas launch for a pure copy.
_SMALL_FALLBACK_BYTES = 1 << 20  # 1 MiB
# Keep double-buffered (inputs + output) blocks well inside v7x's 32 MiB scoped
# VMEM default (64 MiB physical); also fine on v5e/v6e.
_VMEM_BUDGET_BYTES = 16 * 1024 * 1024
_MAX_TILE_LANES = 8192  # target 2K-8K lanes per step for good HBM utilization


def _concat_channels_kernel(*refs, channels):
    """refs = (*in_refs, out_ref).

    Input block i : (1, C_i, T)       (T = H*W or a 128-multiple spatial tile)
    Output block  : (1, sum(C_i), T)
    Each input is copied into its static channel offset of the output block.
    """
    out_ref = refs[-1]
    in_refs = refs[:-1]
    off = 0
    for r, c in zip(in_refs, channels):
        out_ref[:, off:off + c, :] = r[...]
        off += c


def _choose_spatial_tile(hw, c_total, itemsize):
    """Largest lane tile that (a) is hw itself, or (b) is a multiple of 128 that
    divides hw, while keeping double-buffered in+out blocks under budget."""
    per_lane = 2 * 2 * c_total * itemsize  # (inputs + output) x double-buffer
    t_cap = min(_MAX_TILE_LANES, max(_VMEM_BUDGET_BYTES // per_lane, 128))
    if hw <= t_cap:
        return hw
    t = (t_cap // 128) * 128
    while t >= 128:
        if hw % t == 0:
            return t
        t -= 128
    return None  # no clean 128-multiple tile -> caller falls back


def pallas_concat_channels(arrays, *, force_pallas=False):
    """Concatenate NCHW arrays along the channel axis (axis=1)."""
    assert len(arrays) >= 1
    if len(arrays) == 1:
        return arrays[0]

    n, _, h, w = arrays[0].shape
    dtype = arrays[0].dtype
    for a in arrays:
        assert a.ndim == 4 and a.shape[0] == n and a.shape[2:] == (h, w)
        assert a.dtype == dtype, "torch.cat requires matching dtypes"

    channels = tuple(int(a.shape[1]) for a in arrays)
    c_total = sum(channels)
    hw = h * w
    itemsize = jnp.dtype(dtype).itemsize
    out_bytes = n * c_total * hw * itemsize

    tile = _choose_spatial_tile(hw, c_total, itemsize)
    if (not force_pallas and out_bytes < _SMALL_FALLBACK_BYTES) or tile is None:
        # Pure data movement: XLA's concat is HBM-bound and has no launch /
        # pipeline-prologue overhead at small sizes (or un-tileable H*W).
        return jnp.concatenate(arrays, axis=1)

    # Flatten spatial dims -> lane-dense blocks (last dim = H*W or 128-multiple
    # tile), avoiding the W-wide masked vst.msk stores of the naive layout.
    flat = [a.reshape(n, c, hw) for a, c in zip(arrays, channels)]
    num_tiles = hw // tile

    kernel = functools.partial(_concat_channels_kernel, channels=channels)

    in_specs = [
        pl.BlockSpec((1, c, tile), lambda b, s: (b, 0, s)) for c in channels
    ]
    out_spec = pl.BlockSpec((1, c_total, tile), lambda b, s: (b, 0, s))

    out_flat = pl.pallas_call(
        kernel,
        out_shape=jax.ShapeDtypeStruct((n, c_total, hw), dtype),
        grid=(n, num_tiles),
        in_specs=in_specs,
        out_specs=out_spec,
        compiler_params=pltpu.CompilerParams(
            # Both grid axes are independent copies: lets megacore (v7x: 2 TCs)
            # shard them; a no-op on single-TC v5e/v6e.
            dimension_semantics=("parallel", "parallel"),
        ),
    )(*flat)
    return out_flat.reshape(n, c_total, h, w)


class CorrespondenceMapBase:
    """JAX/Pallas port of the PyTorch CorrespondenceMapBase module."""

    def __init__(self, in_channels, bn=False):
        # The PyTorch __init__ stores nothing / creates no parameters.
        self.in_channels = in_channels
        self.bn = bn

    def forward(self, x1, x2=None, x3=None, *, force_pallas=False):
        x = x1
        if x2 is not None and x3 is None:
            x = pallas_concat_channels([x1, x2], force_pallas=force_pallas)
        elif x2 is None and x3 is not None:
            x = pallas_concat_channels([x1, x3], force_pallas=force_pallas)
        elif x2 is not None and x3 is not None:
            x = pallas_concat_channels([x1, x2, x3], force_pallas=force_pallas)
        return x

    __call__ = forward


if __name__ == "__main__":
    key = jax.random.PRNGKey(0)
    k1, k2, k3, k4 = jax.random.split(key, 4)

    N, C, H, W = 2, 4, 16, 16
    x1 = jax.random.normal(k1, (N, C, H, W), dtype=jnp.float32)
    x2 = jax.random.normal(k2, (N, C, H, W), dtype=jnp.float32)
    x3 = jax.random.normal(k3, (N, C, H, W), dtype=jnp.float32)
    x2b = jax.random.normal(k4, (N, 6, H, W), dtype=jnp.float32)  # uneven C

    module = CorrespondenceMapBase(in_channels=C)

    # Case 1: only x1 (identity)
    out1 = module(x1)
    jax.block_until_ready(out1)
    np.testing.assert_allclose(np.asarray(out1), np.asarray(x1))

    # Cases 2-4 through the Pallas kernel (force past the small-size fallback).
    out2 = module(x1, x2=x2, force_pallas=True)
    jax.block_until_ready(out2)
    np.testing.assert_allclose(np.asarray(out2),
                               np.asarray(jnp.concatenate([x1, x2], axis=1)))

    out3 = module(x1, x3=x3, force_pallas=True)
    jax.block_until_ready(out3)
    np.testing.assert_allclose(np.asarray(out3),
                               np.asarray(jnp.concatenate([x1, x3], axis=1)))

    out4 = module(x1, x2=x2, x3=x3, force_pallas=True)
    jax.block_until_ready(out4)
    np.testing.assert_allclose(np.asarray(out4),
                               np.asarray(jnp.concatenate([x1, x2, x3], axis=1)))
    assert out4.shape == (N, 3 * C, H, W)

    # Uneven channel counts through the Pallas kernel.
    out5 = module(x1, x2=x2b, x3=x3, force_pallas=True)
    jax.block_until_ready(out5)
    np.testing.assert_allclose(np.asarray(out5),
                               np.asarray(jnp.concatenate([x1, x2b, x3], axis=1)))
    assert out5.shape == (N, C + 6 + C, H, W)

    # Default path (small tensors -> jnp.concatenate fallback) still correct.
    out6 = module(x1, x2=x2, x3=x3)
    jax.block_until_ready(out6)
    np.testing.assert_allclose(np.asarray(out6), np.asarray(out4))

    print("KERNEL_OK")
</pallas_src>

<mosaic_0001>
module attributes {stable_mosaic.version = 11 : i64} {
  func.func @_concat_channels_kernel(%arg0: i32, %arg1: i32, %arg2: memref<1x4x256xf32, #tpu.memory_space<vmem>>, %arg3: memref<1x4x256xf32, #tpu.memory_space<vmem>>, %arg4: memref<1x8x256xf32, #tpu.memory_space<vmem>>) attributes {dimension_semantics = [#tpu.dimension_semantics<parallel>, #tpu.dimension_semantics<parallel>], iteration_bounds = array<i64: 2, 1>, scalar_prefetch = 0 : i64, scratch_operands = 0 : i64, tpu.core_type = #tpu.core_type<tc>, window_params = [{transform_indices = @transform_0, window_bounds = array<i64: 1, 4, 256>}, {transform_indices = @transform_1, window_bounds = array<i64: 1, 4, 256>}, {transform_indices = @transform_2, window_bounds = array<i64: 1, 8, 256>}]} {
    %c0 = arith.constant 0 : index
    %c0_0 = arith.constant 0 : index
    %c0_1 = arith.constant 0 : index
    %0 = vector.load %arg2[%c0, %c0_0, %c0_1] : memref<1x4x256xf32, #tpu.memory_space<vmem>>, vector<1x4x256xf32>
    %c0_2 = arith.constant 0 : index
    %c0_3 = arith.constant 0 : index
    %c0_4 = arith.constant 0 : index
    %1 = vector.load %arg4[%c0_2, %c0_3, %c0_4] : memref<1x8x256xf32, #tpu.memory_space<vmem>>, vector<1x4x256xf32>
    tpu.vector_store %arg4[%c0_2, %c0_3, %c0_4], %0 {strides = array<i32>} : memref<1x8x256xf32, #tpu.memory_space<vmem>>, vector<1x4x256xf32>,
    %c0_5 = arith.constant 0 : index
    %c0_6 = arith.constant 0 : index
    %c0_7 = arith.constant 0 : index
    %2 = vector.load %arg3[%c0_5, %c0_6, %c0_7] : memref<1x4x256xf32, #tpu.memory_space<vmem>>, vector<1x4x256xf32>
    %c0_8 = arith.constant 0 : index
    %c4 = arith.constant 4 : index
    %c0_9 = arith.constant 0 : index
    %3 = vector.load %arg4[%c0_8, %c4, %c0_9] : memref<1x8x256xf32, #tpu.memory_space<vmem>>, vector<1x4x256xf32>
    tpu.vector_store %arg4[%c0_8, %c4, %c0_9], %2 {strides = array<i32>} : memref<1x8x256xf32, #tpu.memory_space<vmem>>, vector<1x4x256xf32>,
    return
  }
  func.func @transform_0(%arg0: i32, %arg1: i32) -> (i32, i32, i32) {
    %c0_i32 = arith.constant 0 : i32
    %c0_i32_0 = arith.constant 0 : i32
    return %arg0, %c0_i32, %arg1 : i32, i32, i32
  }
  func.func @transform_1(%arg0: i32, %arg1: i32) -> (i32, i32, i32) {
    %c0_i32 = arith.constant 0 : i32
    %c0_i32_0 = arith.constant 0 : i32
    return %arg0, %c0_i32, %arg1 : i32, i32, i32
  }
  func.func @transform_2(%arg0: i32, %arg1: i32) -> (i32, i32, i32) {
    %c0_i32 = arith.constant 0 : i32
    %c0_i32_0 = arith.constant 0 : i32
    return %arg0, %c0_i32, %arg1 : i32, i32, i32
  }
}

</mosaic_0001>

<llo_original>
// kernel: tpu_custom_call.1
$region0: #{tpu_custom_call.1}
  #allocation0 [shape = 'u32[]', space=smem, size = 0x4, offset = 0x4, fixed_abs, tag = 'smem constant byte address 0x4 - core index']
  #allocation1 [shape = 'u32[144,128]{1,0:T(1,128)}', space=vmem, size = 0x12000, scoped, tag = 'internal scratch']
  %s0 = inlined_call_operand.hbm [shape: f32[2,4,256], index: 0, kind: input, shape index: {}]
  %s1 = inlined_call_operand.hbm [shape: f32[2,4,256], index: 1, kind: input, shape index: {}]
  %s2 = inlined_call_operand.hbm [shape: f32[2,8,256], index: 2, kind: output, shape index: {}]
  %s3 = sld [smem:[#allocation0]]
  $region49: #{tpu_custom_call.1} parent=0
    _
  %s5 = ssub.s32 1, %s3
  %s6 = scalar_select 0, %s5, %s3
  $region1: #{tpu_custom_call.1} parent=0
    #allocation2 [shape = 'u8[8192]{0}', space=vmem, size = 0x2000, scoped, tag = 'input window, operand 0']
    #allocation3 [shape = 's32[2]{0}', space=sflag, size = 0x8, scoped, tag = 'scoped memory for tpu_custom_call.1']
    #allocation4 [shape = 's32[2]{0}', space=sflag, size = 0x8, scoped, tag = 'scoped memory for tpu_custom_call.1']
    #allocation5 [shape = 'u8[8192]{0}', space=vmem, size = 0x2000, scoped, tag = 'input window, operand 1']
    #allocation6 [shape = 's32[2]{0}', space=sflag, size = 0x8, scoped, tag = 'scoped memory for tpu_custom_call.1']
    #allocation7 [shape = 'u8[16384]{0}', space=vmem, size = 0x4000, scoped, tag = 'output window, operand 0']
    %7 = vsyncpa [#allocation3], 0
    %s8 = scalar_lea.sflag [#allocation3], 1
    %9 = vsyncpa %s8, 0
    %10 = vsyncpa [#allocation6], 0
    %s11 = scalar_lea.sflag [#allocation6], 1
    %12 = vsyncpa %s11, 0
    %13 = vsyncpa [#allocation4], 0
    %s14 = scalar_lea.sflag [#allocation4], 1
    %15 = vsyncpa %s14, 0
    loop: start=0, step=1, limit=4
    $region2: #{tpu_custom_call.1} parent=1 // loop_pre_header
      _
    $region3: #{tpu_custom_call.1} parent=1 // loop_header
      %s17 = sphi 0, %s21
      %p18 = scmp.ge.s32.totalorder %s17, 4
      %s24 = sphi 0, %s36
      %s25 = sphi 0, %s32
      %s26 = sphi 0, %s24
      %s27 = sphi 0, %s25
      %s28 = sphi 0, %s26
      %s29 = sphi 0, %s27
      %s41 = sphi 0, %s43
      %s44 = sphi 0, %s41
      %s45 = sphi 0, %s44
      %s61 = sphi 0, %s45
      %s69 = sphi 0, %s71
      %s72 = sphi 0, %s69
      %s73 = sphi 0, %s72
      %s89 = sphi 0, %s73
      %s97 = sphi 0, %s99
      %s100 = sphi 0, %s97
      %s101 = sphi 0, %s100
      %s117 = sphi 0, %s101
    $region4: #{tpu_custom_call.1} parent=1 // loop_header_branch
      %20 = sbr.rel (%p18) target = $region8
    $region5: #{tpu_custom_call.1} parent=1 // loop_body
      %s22 = ssub.s32 %s17, 1
      %s23 = ssub.s32 %s17, 2
      %s30 = sadd.s32 1, %s25
      %p31 = scmp.ge.s32.totalorder %s30, 1
      %s32 = scalar_select %p31, 0, %s30
      %s33 = sadd.s32 1, %s24
      %s34 = scalar_select %p31, %s33, %s24
      %p35 = scmp.ge.s32.totalorder %s34, 2
      %s36 = scalar_select %p35, 0, %s34
      %s37 = ssub.s32 %s24, %s36
      %s38 = ssub.s32 %s25, %s32
      %s39 = sor.u32 %s37, %s38
      %p40 = scmp.eq.s32.totalorder %s39, 0
      %s42 = sadd.s32 %s41, 1
      %s43 = scalar_select %p40, %s41, %s42
      %p46 = pneg %p40
      %p47 = scmp.eq.s32.totalorder %s17, 1
      %p48 = por %p46, %p47
      %p49 = scmp.ne.s32.totalorder %s41, %s44
      %p50 = scmp.eq.s32.totalorder %s17, 0
      %p51 = por %p49, %p50
      %p52 = scmp.ne.s32.totalorder %s41, %s44
      %p53 = scmp.eq.s32.totalorder %s22, 1
      %p54 = por %p52, %p53
      %p55 = scmp.ne.s32.totalorder %s44, %s45
      %p56 = scmp.eq.s32.totalorder %s22, 0
      %p57 = por %p55, %p56
      %p58 = scmp.ne.s32.totalorder %s44, %s45
      %p59 = scmp.eq.s32.totalorder %s23, 1
      %p60 = por %p58, %p59
      %p62 = scmp.ne.s32.totalorder %s45, %s61
      %p63 = scmp.eq.s32.totalorder %s23, 0
      %p64 = por %p62, %p63
      %s65 = ssub.s32 %s24, %s36
      %s66 = ssub.s32 %s25, %s32
      %s67 = sor.u32 %s65, %s66
      %p68 = scmp.eq.s32.totalorder %s67, 0
      %s70 = sadd.s32 %s69, 1
      %s71 = scalar_select %p68, %s69, %s70
      %p74 = pneg %p68
      %p75 = scmp.eq.s32.totalorder %s17, 1
      %p76 = por %p74, %p75
      %p77 = scmp.ne.s32.totalorder %s69, %s72
      %p78 = scmp.eq.s32.totalorder %s17, 0
      %p79 = por %p77, %p78
      %p80 = scmp.ne.s32.totalorder %s69, %s72
      %p81 = scmp.eq.s32.totalorder %s22, 1
      %p82 = por %p80, %p81
      %p83 = scmp.ne.s32.totalorder %s72, %s73
      %p84 = scmp.eq.s32.totalorder %s22, 0
      %p85 = por %p83, %p84
      %p86 = scmp.ne.s32.totalorder %s72, %s73
      %p87 = scmp.eq.s32.totalorder %s23, 1
      %p88 = por %p86, %p87
      %p90 = scmp.ne.s32.totalorder %s73, %s89
      %p91 = scmp.eq.s32.totalorder %s23, 0
      %p92 = por %p90, %p91
      %s93 = ssub.s32 %s24, %s36
      %s94 = ssub.s32 %s25, %s32
      %s95 = sor.u32 %s93, %s94
      %p96 = scmp.eq.s32.totalorder %s95, 0
      %s98 = sadd.s32 %s97, 1
      %s99 = scalar_select %p96, %s97, %s98
      %p102 = pneg %p96
      %p103 = scmp.eq.s32.totalorder %s17, 1
      %p104 = por %p102, %p103
      %p105 = scmp.ne.s32.totalorder %s97, %s100
      %p106 = scmp.eq.s32.totalorder %s17, 0
      %p107 = por %p105, %p106
      %p108 = scmp.ne.s32.totalorder %s97, %s100
      %p109 = scmp.eq.s32.totalorder %s22, 1
      %p110 = por %p108, %p109
      %p111 = scmp.ne.s32.totalorder %s100, %s101
      %p112 = scmp.eq.s32.totalorder %s22, 0
      %p113 = por %p111, %p112
      %p114 = scmp.ne.s32.totalorder %s100, %s101
      %p115 = scmp.eq.s32.totalorder %s23, 1
      %p116 = por %p114, %p115
      %p118 = scmp.ne.s32.totalorder %s101, %s117
      %p119 = scmp.eq.s32.totalorder %s23, 0
      %p120 = por %p118, %p119
      %p121 = scmp.le.s32.totalorder 1, %s17
      %p122 = scmp.lt.s32.totalorder %s17, 3
      %p123 = pnand %p121, %p122
      %p124 = pneg %p123
      // Predicated region
      $region9: #{tpu_custom_call.1} parent=5 // pred_check
        _
      $region10: #{tpu_custom_call.1} parent=5 // pred_check_branch
        %126 = sbr.rel (%p123) target = $region12
      $region11: #{tpu_custom_call.1} parent=5 // pred_region
        %s127 = ssub.s32 %s17, 1
      $region12: #{tpu_custom_call.1} parent=5 // pred_fallthru
        _
      %p128 = scmp.lt.s32.totalorder %s17, 2
      // Predicated region
      $region13: #{tpu_custom_call.1} parent=5 // pred_check
        %p129 = pneg %p128
      $region14: #{tpu_custom_call.1} parent=5 // pred_check_branch
        %131 = sbr.rel (%p129) target = $region16
      $region15: #{tpu_custom_call.1} parent=5 // pred_region
        // Predicated region
        $region17: #{tpu_custom_call.1} parent=15 // pred_check
          %p132 = pneg %p51
        $region18: #{tpu_custom_call.1} parent=15 // pred_check_branch
          %134 = sbr.rel (%p132) target = $region20
        $region19: #{tpu_custom_call.1} parent=15 // pred_region
          %s135 = sand.u32 %s41, 1
          %s136 = scalar_lea.sflag [#allocation3], %s135
          %s137 = sand.u32 %s41, 1
          %s138 = smul.addr %s137, 8
          %s139 = scalar_lea.vmem [#allocation2], %s138
          %s140 = smul.u32 2, %s25
          %s142 = ssub.s32 128, 128
          %143 = vsyncadd %s136, %s142
          %s144 = smul.addr %s24, 2
          %s145 = sadd.s32 %s140, %s144
          %s146 = smul.addr %s145, 64
          %s147 = scalar_lea.hbm %s0, %s146
          %s149 = sshll.u32 %s139, 4
          %s150 = int_to_ptr.vmem [resolvable:$true] %s149
          %152 = dma.hbm_to_vmem [thread:$0]  %s147, 128, %s150, %s136
        $region20: #{tpu_custom_call.1} parent=15 // pred_fallthru
          _
        // Predicated region
        $region21: #{tpu_custom_call.1} parent=15 // pred_check
          %p153 = pneg %p79
        $region22: #{tpu_custom_call.1} parent=15 // pred_check_branch
          %155 = sbr.rel (%p153) target = $region24
        $region23: #{tpu_custom_call.1} parent=15 // pred_region
          %s156 = sand.u32 %s69, 1
          %s157 = scalar_lea.sflag [#allocation6], %s156
          %s158 = sand.u32 %s69, 1
          %s159 = smul.addr %s158, 8
          %s160 = scalar_lea.vmem [#allocation5], %s159
          %s161 = smul.u32 2, %s25
          %s163 = ssub.s32 128, 128
          %164 = vsyncadd %s157, %s163
          %s165 = smul.addr %s24, 2
          %s166 = sadd.s32 %s161, %s165
          %s167 = smul.addr %s166, 64
          %s168 = scalar_lea.hbm %s1, %s167
          %s170 = sshll.u32 %s160, 4
          %s171 = int_to_ptr.vmem [resolvable:$true] %s170
          %173 = dma.hbm_to_vmem [thread:$0]  %s168, 128, %s171, %s157
        $region24: #{tpu_custom_call.1} parent=15 // pred_fallthru
          _
      $region16: #{tpu_custom_call.1} parent=5 // pred_fallthru
        _
      %p174 = scmp.le.s32.totalorder 1, %s17
      %p175 = scmp.lt.s32.totalorder %s17, 3
      %p176 = pnand %p174, %p175
      %p177 = pneg %p176
      // Predicated region
      $region25: #{tpu_custom_call.1} parent=5 // pred_check
        _
      $region26: #{tpu_custom_call.1} parent=5 // pred_check_branch
        %179 = sbr.rel (%p176) target = $region28
      $region27: #{tpu_custom_call.1} parent=5 // pred_region
        %s180 = ssub.s32 %s17, 1
        %s181 = sand.u32 %s44, 1
        %s182 = scalar_lea.sflag [#allocation3], %s181
        %s183 = sand.u32 %s44, 1
        %s184 = smul.addr %s183, 8
        %s185 = scalar_lea.vmem [#allocation2], %s184
        // Predicated region
        $region29: #{tpu_custom_call.1} parent=27 // pred_check
          %p186 = pneg %p57
        $region30: #{tpu_custom_call.1} parent=27 // pred_check_branch
          %188 = sbr.rel (%p186) target = $region32
        $region31: #{tpu_custom_call.1} parent=27 // pred_region
          %189 = dma.done %s182, 128
        $region32: #{tpu_custom_call.1} parent=27 // pred_fallthru
          _
        %s190 = sand.u32 %s72, 1
        %s191 = scalar_lea.sflag [#allocation6], %s190
        %s192 = sand.u32 %s72, 1
        %s193 = smul.addr %s192, 8
        %s194 = scalar_lea.vmem [#allocation5], %s193
        // Predicated region
        $region33: #{tpu_custom_call.1} parent=27 // pred_check
          %p195 = pneg %p85
        $region34: #{tpu_custom_call.1} parent=27 // pred_check_branch
          %197 = sbr.rel (%p195) target = $region36
        $region35: #{tpu_custom_call.1} parent=27 // pred_region
          %198 = dma.done %s191, 128
        $region36: #{tpu_custom_call.1} parent=27 // pred_fallthru
          _
        %s199 = sand.u32 %s44, 1
        %s200 = scalar_lea.sflag [#allocation3], %s199
        %s201 = sand.u32 %s44, 1
        %s202 = smul.addr %s201, 8
        %s203 = scalar_lea.vmem [#allocation2], %s202
        %p204 = pneg %p57
        %p205 = pneg %p54
        %s206 = sand.u32 %s72, 1
        %s207 = scalar_lea.sflag [#allocation6], %s206
        %s208 = sand.u32 %s72, 1
        %s209 = smul.addr %s208, 8
        %s210 = scalar_lea.vmem [#allocation5], %s209
        %p211 = pneg %p85
        %p212 = pneg %p82
        %p213 = pneg %p113
        %p214 = pneg %p110
        %s215 = sand.u32 %s100, 1
        %s216 = scalar_lea.sflag [#allocation4], %s215
        %s217 = sand.u32 %s100, 1
        %s218 = smul.addr %s217, 16
        %s219 = scalar_lea.vmem [#allocation7], %s218
        %s220 = smul.u32 2, %s27
        %s221 = smul.u32 2, %s27
        %s222 = smul.u32 2, %s27
        %v223 = vld [vmem:[%s185] sm:$0xff]
        %v225 = vcombine.high %v223, %v223
        %227 = vst [vmem:[%s219] sm:$0xf] %v223
        %228 = vst [vmem:[%s219 + $0x8] sm:$0xf] %v225
        %v229 = vld [vmem:[%s194] sm:$0xff]
        %v231 = vcombine.low %v229, %v229
        %233 = vst [vmem:[%s219] sm:$0xf0] %v231
        %234 = vst [vmem:[%s219 + $0x8] sm:$0xf0] %v229
        %s235 = sand.u32 %s100, 1
        %s236 = scalar_lea.sflag [#allocation4], %s235
        %s237 = sand.u32 %s100, 1
        %s238 = smul.addr %s237, 16
        %s239 = scalar_lea.vmem [#allocation7], %s238
        // Predicated region
        $region37: #{tpu_custom_call.1} parent=27 // pred_check
          %p240 = pneg %p110
        $region38: #{tpu_custom_call.1} parent=27 // pred_check_branch
          %242 = sbr.rel (%p240) target = $region40
        $region39: #{tpu_custom_call.1} parent=27 // pred_region
          %s243 = smul.u32 2, %s27
          %s245 = ssub.s32 256, 256
          %246 = vsyncadd %s236, %s245
          %s247 = smul.addr %s26, 2
          %s248 = sadd.s32 %s243, %s247
          %s249 = smul.addr %s248, 128
          %s250 = scalar_lea.hbm %s2, %s249
          %s252 = sshll.u32 %s239, 4
          %s253 = int_to_ptr.vmem [resolvable:$true] %s252
          %255 = dma.vmem_to_hbm [thread:$0]  %s253, 256, %s250, %s236
        $region40: #{tpu_custom_call.1} parent=27 // pred_fallthru
          _
      $region28: #{tpu_custom_call.1} parent=5 // pred_fallthru
        _
      %p256 = scmp.le.s32.totalorder 2, %s17
      // Predicated region
      $region41: #{tpu_custom_call.1} parent=5 // pred_check
        %p257 = pneg %p256
      $region42: #{tpu_custom_call.1} parent=5 // pred_check_branch
        %259 = sbr.rel (%p257) target = $region44
      $region43: #{tpu_custom_call.1} parent=5 // pred_region
        %s260 = ssub.s32 %s17, 2
        // Predicated region
        $region45: #{tpu_custom_call.1} parent=43 // pred_check
          %p261 = pneg %p116
        $region46: #{tpu_custom_call.1} parent=43 // pred_check_branch
          %263 = sbr.rel (%p261) target = $region48
        $region47: #{tpu_custom_call.1} parent=43 // pred_region
          %s264 = sand.u32 %s101, 1
          %s265 = scalar_lea.sflag [#allocation4], %s264
          %s266 = sand.u32 %s101, 1
          %s267 = smul.addr %s266, 16
          %s268 = scalar_lea.vmem [#allocation7], %s267
          %269 = dma.done %s265, 256
        $region48: #{tpu_custom_call.1} parent=43 // pred_fallthru
          _
      $region44: #{tpu_custom_call.1} parent=5 // pred_fallthru
        _
    $region6: #{tpu_custom_call.1} parent=1 // loop_footer
      %s21 = sadd.s32 1, %s17
    $region7: #{tpu_custom_call.1} parent=1 // loop_footer_branch
      %16 = sbr.rel target = $region3
    $region8: #{tpu_custom_call.1} parent=1 // loop_exit
      _
    %270 = vsyncpa [#allocation3], 1
    %s271 = scalar_lea.sflag [#allocation3], 1
    %272 = vsyncpa %s271, 1
    %273 = vsyncpa [#allocation6], 1
    %s274 = scalar_lea.sflag [#allocation6], 1
    %275 = vsyncpa %s274, 1
    %276 = vsyncpa [#allocation4], 1
    %s277 = scalar_lea.sflag [#allocation4], 1
    %278 = vsyncpa %s277, 1

</llo_original>
